<compile_context>
chip_gen: v7x
topology: tpu7x:2x2x1
jax: 0.10.0
libtpu: 0.0.40
codegen_flags: <defaults>
</compile_context>

<pallas_src>
import jax
import jax.numpy as jnp
from jax.experimental import pallas as pl
from jax.experimental.pallas import tpu as pltpu


def _mlp_kernel(x_ref, wg_ref, wu_ref, wd_ref, o_ref, acc_ref):
    k = pl.program_id(1)

    @pl.when(k == 0)
    def _():
        acc_ref[...] = jnp.zeros_like(acc_ref)

    x = x_ref[...]
    # Native-dtype operands, f32 accumulation on the MXU.
    gate = jnp.dot(x, wg_ref[...], preferred_element_type=jnp.float32)
    up = jnp.dot(x, wu_ref[...], preferred_element_type=jnp.float32)
    # SiLU in f32 (sigmoid on the EUP), then back to the weight dtype so the
    # down projection runs at full bf16 MXU throughput when params are bf16.
    h = (gate * jax.nn.sigmoid(gate) * up).astype(wd_ref.dtype)
    acc_ref[...] += jnp.dot(h, wd_ref[...], preferred_element_type=jnp.float32)

    @pl.when(k == pl.num_programs(1) - 1)
    def _():
        o_ref[...] = acc_ref[...].astype(o_ref.dtype)


def _round_up(x, m):
    return ((x + m - 1) // m) * m


def _pick_block(dim, target, multiple):
    """Largest divisor of `dim` that is <= target and a multiple of `multiple`;
    falls back to `dim` (no tiling on this axis) if none exists."""
    best = None
    d = multiple
    while d <= min(dim, target):
        if dim % d == 0:
            best = d
        d += multiple
    return best if best is not None else dim


def mlp_pallas(x, w_gate_up, w_down, *, block_tokens=None, block_i=None,
               vmem_limit_bytes=48 * 1024 * 1024):
    """x: [T, H]; w_gate_up: [H, 2*I]; w_down: [I, H]."""
    T, H = x.shape
    two_I = w_gate_up.shape[1]
    I = two_I // 2
    assert w_gate_up.shape == (H, two_I)
    assert w_down.shape == (I, H)

    # --- token tiling (bounded, multiple of 8, padded if necessary) ---------
    if block_tokens is None:
        block_tokens = min(256, _round_up(T, 8))
    T_pad = _round_up(T, block_tokens)
    if T_pad != T:
        x = jnp.pad(x, ((0, T_pad - T), (0, 0)))

    # --- intermediate (I) tiling --------------------------------------------
    if I % 128 == 0:
        if block_i is None:
            block_i = _pick_block(I, 1024, 128)
        assert I % block_i == 0 and block_i % 128 == 0
        num_k = I // block_i
        w_gate_in, w_up_in, up_off = w_gate_up, w_gate_up, num_k
    else:
        # TODO(synk): intermediate sizes not a multiple of 128 fall back to
        # wrapper-side slicing of the fused weight (extra HBM copies).
        block_i, num_k, up_off = I, 1, 0
        w_gate_in, w_up_in = w_gate_up[:, :I], w_gate_up[:, I:]

    grid = (T_pad // block_tokens, num_k)

    out = pl.pallas_call(
        _mlp_kernel,
        out_shape=jax.ShapeDtypeStruct((T_pad, H), x.dtype),
        grid_spec=pltpu.PrefetchScalarGridSpec(
            num_scalar_prefetch=0,
            grid=grid,
            in_specs=[
                # x tile: resident per token block.
                pl.BlockSpec((block_tokens, H), lambda i, k: (i, 0)),
                # gate columns of the fused weight: block k.
                pl.BlockSpec((H, block_i), lambda i, k: (0, k)),
                # up columns of the fused weight: block k + I/TI.
                pl.BlockSpec((H, block_i), lambda i, k: (0, k + up_off)),
                # down-projection rows: block k.
                pl.BlockSpec((block_i, H), lambda i, k: (k, 0)),
            ],
            # Output block constant across k -> VMEM-resident across reduction.
            out_specs=pl.BlockSpec((block_tokens, H), lambda i, k: (i, 0)),
            scratch_shapes=[pltpu.VMEM((block_tokens, H), jnp.float32)],
        ),
        compiler_params=pltpu.CompilerParams(
            dimension_semantics=("parallel", "arbitrary"),
            vmem_limit_bytes=vmem_limit_bytes),
    )(x, w_gate_in, w_up_in, w_down)

    return out[:T] if T_pad != T else out


def mlp_reference(x, w_gate_up, w_down):
    I = w_gate_up.shape[1] // 2
    gu = x.astype(jnp.float32) @ w_gate_up.astype(jnp.float32)
    gate, up = gu[:, :I], gu[:, I:]
    h = jax.nn.silu(gate) * up
    return (h @ w_down.astype(jnp.float32)).astype(x.dtype)


if __name__ == "__main__":
    key = jax.random.PRNGKey(0)
    kx, kgu, kd, kx2 = jax.random.split(key, 4)

    # Small shapes consistent with the module: seq=16, hidden=128, intermediate=256.
    T, H, I = 16, 128, 256
    x = jax.random.normal(kx, (T, H), dtype=jnp.float32)
    w_gate_up = jax.random.normal(kgu, (H, 2 * I), dtype=jnp.float32) * 0.05
    w_down = jax.random.normal(kd, (I, H), dtype=jnp.float32) * 0.05

    # f32 path: tight tolerance (identical math, f32 accumulation).
    out = jax.block_until_ready(mlp_pallas(x, w_gate_up, w_down))
    ref = mlp_reference(x, w_gate_up, w_down)
    assert out.shape == (T, H)
    assert jnp.allclose(out, ref, atol=1e-4, rtol=1e-4)

    # bf16 path (production dtype: bf16 operands, f32 MXU accumulation), with
    # an uneven token count to exercise padding. Looser tolerance since h is
    # cast to bf16 before the down projection.
    Tb = 12
    xb = jax.random.normal(kx2, (Tb, H), dtype=jnp.bfloat16)
    wgub = w_gate_up.astype(jnp.bfloat16)
    wdb = w_down.astype(jnp.bfloat16)
    outb = jax.block_until_ready(mlp_pallas(xb, wgub, wdb))
    refb = mlp_reference(xb, wgub, wdb)
    assert outb.shape == (Tb, H)
    assert jnp.allclose(outb.astype(jnp.float32), refb.astype(jnp.float32),
                        atol=5e-2, rtol=5e-2)

    print("KERNEL_OK")
</pallas_src>

<mosaic_0001>
module attributes {stable_mosaic.version = 11 : i64} {
  func.func @_mlp_kernel(%arg0: i32, %arg1: i32, %arg2: memref<16x128xf32, #tpu.memory_space<vmem>>, %arg3: memref<128x256xf32, #tpu.memory_space<vmem>>, %arg4: memref<128x256xf32, #tpu.memory_space<vmem>>, %arg5: memref<256x128xf32, #tpu.memory_space<vmem>>, %arg6: memref<16x128xf32, #tpu.memory_space<vmem>>, %arg7: memref<16x128xf32, #tpu.memory_space<vmem>>) attributes {dimension_semantics = [#tpu.dimension_semantics<parallel>, #tpu.dimension_semantics<arbitrary>], iteration_bounds = array<i64: 1, 1>, scalar_prefetch = 0 : i64, scratch_operands = 1 : i64, tpu.core_type = #tpu.core_type<tc>, window_params = [{transform_indices = @transform_0, window_bounds = array<i64: 16, 128>}, {transform_indices = @transform_1, window_bounds = array<i64: 128, 256>}, {transform_indices = @transform_2, window_bounds = array<i64: 128, 256>}, {transform_indices = @transform_3, window_bounds = array<i64: 256, 128>}, {transform_indices = @transform_4, window_bounds = array<i64: 16, 128>}]} {
    %c0_i32 = arith.constant 0 : i32
    %0 = arith.cmpi eq, %arg1, %c0_i32 : i32
    %1 = arith.extui %0 : i1 to i32
    %c0_i32_0 = arith.constant 0 : i32
    %2 = arith.cmpi ne, %1, %c0_i32_0 : i32
    scf.if %2 {
      %cst_17 = arith.constant 0.000000e+00 : f32
      %23 = vector.broadcast %cst_17 : f32 to vector<16x128xf32>
      %c0_18 = arith.constant 0 : index
      %c0_19 = arith.constant 0 : index
      %24 = vector.load %arg7[%c0_18, %c0_19] : memref<16x128xf32, #tpu.memory_space<vmem>>, vector<16x128xf32>
      tpu.vector_store %arg7[%c0_18, %c0_19], %23 {strides = array<i32>} : memref<16x128xf32, #tpu.memory_space<vmem>>, vector<16x128xf32>,
    } else {
    }
    %c0 = arith.constant 0 : index
    %c0_1 = arith.constant 0 : index
    %3 = vector.load %arg2[%c0, %c0_1] : memref<16x128xf32, #tpu.memory_space<vmem>>, vector<16x128xf32>
    %c0_2 = arith.constant 0 : index
    %c0_3 = arith.constant 0 : index
    %4 = vector.load %arg3[%c0_2, %c0_3] : memref<128x256xf32, #tpu.memory_space<vmem>>, vector<128x256xf32>
    %cst = arith.constant dense<0.000000e+00> : vector<16x256xf32>
    %5 = tpu.matmul %3, %4, %cst {dimension_numbers = #tpu.dot_dimension_numbers<[1], [0], [0], [1], [0, 0, 1, 1], [], []>} : vector<16x128xf32>, vector<128x256xf32>, vector<16x256xf32> -> vector<16x256xf32>
    %c0_4 = arith.constant 0 : index
    %c0_5 = arith.constant 0 : index
    %6 = vector.load %arg4[%c0_4, %c0_5] : memref<128x256xf32, #tpu.memory_space<vmem>>, vector<128x256xf32>
    %cst_6 = arith.constant dense<0.000000e+00> : vector<16x256xf32>
    %7 = tpu.matmul %3, %6, %cst_6 {dimension_numbers = #tpu.dot_dimension_numbers<[1], [0], [0], [1], [0, 0, 1, 1], [], []>} : vector<16x128xf32>, vector<128x256xf32>, vector<16x256xf32> -> vector<16x256xf32>
    %8 = arith.negf %5 : vector<16x256xf32>
    %9 = math.exp %8 : vector<16x256xf32>
    %cst_7 = arith.constant 1.000000e+00 : f32
    %10 = vector.broadcast %cst_7 : f32 to vector<16x256xf32>
    %11 = arith.addf %10, %9 : vector<16x256xf32>
    %12 = arith.divf %10, %11 : vector<16x256xf32>
    %13 = arith.mulf %5, %12 : vector<16x256xf32>
    %14 = arith.mulf %13, %7 : vector<16x256xf32>
    %c0_8 = arith.constant 0 : index
    %c0_9 = arith.constant 0 : index
    %15 = vector.load %arg7[%c0_8, %c0_9] : memref<16x128xf32, #tpu.memory_space<vmem>>, vector<16x128xf32>
    %c0_10 = arith.constant 0 : index
    %c0_11 = arith.constant 0 : index
    %16 = vector.load %arg5[%c0_10, %c0_11] : memref<256x128xf32, #tpu.memory_space<vmem>>, vector<256x128xf32>
    %cst_12 = arith.constant dense<0.000000e+00> : vector<16x128xf32>
    %17 = tpu.matmul %14, %16, %cst_12 {dimension_numbers = #tpu.dot_dimension_numbers<[1], [0], [0], [1], [0, 0, 1, 1], [], []>} : vector<16x256xf32>, vector<256x128xf32>, vector<16x128xf32> -> vector<16x128xf32>
    %18 = arith.addf %15, %17 : vector<16x128xf32>
    %c0_13 = arith.constant 0 : index
    %c0_14 = arith.constant 0 : index
    %19 = vector.load %arg7[%c0_13, %c0_14] : memref<16x128xf32, #tpu.memory_space<vmem>>, vector<16x128xf32>
    tpu.vector_store %arg7[%c0_13, %c0_14], %18 {strides = array<i32>} : memref<16x128xf32, #tpu.memory_space<vmem>>, vector<16x128xf32>,
    %c0_i32_15 = arith.constant 0 : i32
    %20 = arith.cmpi eq, %arg1, %c0_i32_15 : i32
    %21 = arith.extui %20 : i1 to i32
    %c0_i32_16 = arith.constant 0 : i32
    %22 = arith.cmpi ne, %21, %c0_i32_16 : i32
    scf.if %22 {
      %c0_17 = arith.constant 0 : index
      %c0_18 = arith.constant 0 : index
      %23 = vector.load %arg7[%c0_17, %c0_18] : memref<16x128xf32, #tpu.memory_space<vmem>>, vector<16x128xf32>
      %c0_19 = arith.constant 0 : index
      %c0_20 = arith.constant 0 : index
      %24 = vector.load %arg6[%c0_19, %c0_20] : memref<16x128xf32, #tpu.memory_space<vmem>>, vector<16x128xf32>
      tpu.vector_store %arg6[%c0_19, %c0_20], %23 {strides = array<i32>} : memref<16x128xf32, #tpu.memory_space<vmem>>, vector<16x128xf32>,
    } else {
    }
    return
  }
  func.func @transform_0(%arg0: i32, %arg1: i32) -> (i32, i32) {
    %c0_i32 = arith.constant 0 : i32
    %c0_i32_0 = arith.constant 0 : i32
    return %arg0, %c0_i32 : i32, i32
  }
  func.func @transform_1(%arg0: i32, %arg1: i32) -> (i32, i32) {
    %c0_i32 = arith.constant 0 : i32
    %c0_i32_0 = arith.constant 0 : i32
    return %c0_i32, %arg1 : i32, i32
  }
  func.func @transform_2(%arg0: i32, %arg1: i32) -> (i32, i32) {
    %c1_i32 = arith.constant 1 : i32
    %0 = arith.addi %arg1, %c1_i32 : i32
    %c0_i32 = arith.constant 0 : i32
    %c0_i32_0 = arith.constant 0 : i32
    return %c0_i32, %0 : i32, i32
  }
  func.func @transform_3(%arg0: i32, %arg1: i32) -> (i32, i32) {
    %c0_i32 = arith.constant 0 : i32
    %c0_i32_0 = arith.constant 0 : i32
    return %arg1, %c0_i32 : i32, i32
  }
  func.func @transform_4(%arg0: i32, %arg1: i32) -> (i32, i32) {
    %c0_i32 = arith.constant 0 : i32
    %c0_i32_0 = arith.constant 0 : i32
    return %arg0, %c0_i32 : i32, i32
  }
}

</mosaic_0001>

<llo_original>
// kernel: tpu_custom_call.1
$region0: #{tpu_custom_call.1}
  #allocation0 [shape = 'u32[]', space=smem, size = 0x4, offset = 0x4, fixed_abs, tag = 'smem constant byte address 0x4 - core index']
  #allocation1 [shape = 'u32[144,128]{1,0:T(1,128)}', space=vmem, size = 0x12000, scoped, tag = 'internal scratch']
  #allocation2 [shape = 'f32[16,128]{1,0:T(8,128)}', space=vmem, size = 0x2000, scoped, tag = 'scratch operand']
  %s0 = inlined_call_operand.hbm [shape: f32[16,128], index: 0, kind: input, shape index: {}]
  %s1 = inlined_call_operand.hbm [shape: f32[128,512], index: 1, kind: input, shape index: {}]
  %s2 = inlined_call_operand.hbm [shape: f32[128,512], index: 2, kind: input, shape index: {}]
  %s3 = inlined_call_operand.hbm [shape: f32[256,128], index: 3, kind: input, shape index: {}]
  %s4 = inlined_call_operand.hbm [shape: f32[16,128], index: 4, kind: output, shape index: {}]
  %s5 = sld [smem:[#allocation0]]
  $region50: #{tpu_custom_call.1} parent=0
    _
  %s7 = ssub.s32 1, %s5
  %s8 = scalar_select 0, %s7, %s5
  $region1: #{tpu_custom_call.1} parent=0
    #allocation3 [shape = 'u8[8192]{0}', space=vmem, size = 0x2000, scoped, tag = 'input window, operand 0, single buffered']
    #allocation4 [shape = 's32[1]{0}', space=sflag, size = 0x4, scoped, tag = 'scoped memory for tpu_custom_call.1']
    #allocation5 [shape = 's32[1]{0}', space=sflag, size = 0x4, scoped, tag = 'scoped memory for tpu_custom_call.1']
    #allocation6 [shape = 'u8[131072]{0}', space=vmem, size = 0x20000, scoped, tag = 'input window, operand 1, single buffered']
    #allocation7 [shape = 's32[1]{0}', space=sflag, size = 0x4, scoped, tag = 'scoped memory for tpu_custom_call.1']
    #allocation8 [shape = 'u8[131072]{0}', space=vmem, size = 0x20000, scoped, tag = 'input window, operand 2, single buffered']
    #allocation9 [shape = 'u8[131072]{0}', space=vmem, size = 0x20000, scoped, tag = 'input window, operand 3, single buffered']
    #allocation10 [shape = 's32[1]{0}', space=sflag, size = 0x4, scoped, tag = 'scoped memory for tpu_custom_call.1']
    #allocation11 [shape = 'u8[8192]{0}', space=vmem, size = 0x2000, scoped, tag = 'output window, operand 0, single buffered']
    %9 = vsyncpa [#allocation4], 0
    %10 = vsyncpa [#allocation7], 0
    %11 = vsyncpa [#allocation10], 0
    %12 = vsyncpa [#allocation5], 0
    // Predicated region
    $region2: #{tpu_custom_call.1} parent=1 // pred_check
      _
    $region3: #{tpu_custom_call.1} parent=1 // pred_check_branch
      %14 = sbr.rel (0) target = $region5
    $region4: #{tpu_custom_call.1} parent=1 // pred_region
      %s16 = ssub.s32 256, 256
      %17 = vsyncadd [#allocation4], %s16
      %s18 = sshll.u32 [#allocation3], 4
      %s19 = int_to_ptr.vmem [resolvable:$true] %s18
      %24 = dma.hbm_to_vmem [thread:$0]  %s0, 256, %s19, [#allocation4], 128, 128, 8
    $region5: #{tpu_custom_call.1} parent=1 // pred_fallthru
      _
    // Predicated region
    $region6: #{tpu_custom_call.1} parent=1 // pred_check
      _
    $region7: #{tpu_custom_call.1} parent=1 // pred_check_branch
      %26 = sbr.rel (0) target = $region9
    $region8: #{tpu_custom_call.1} parent=1 // pred_region
      %s28 = ssub.s32 4096, 4096
      %29 = vsyncadd [#allocation7], %s28
      %s30 = sshll.u32 [#allocation6], 4
      %s31 = int_to_ptr.vmem [resolvable:$true] %s30
      %36 = dma.hbm_to_vmem [thread:$0]  %s1, 4096, %s31, [#allocation7], 512, 256, 16
    $region9: #{tpu_custom_call.1} parent=1 // pred_fallthru
      _
    // Predicated region
    $region10: #{tpu_custom_call.1} parent=1 // pred_check
      _
    $region11: #{tpu_custom_call.1} parent=1 // pred_check_branch
      %38 = sbr.rel (0) target = $region13
    $region12: #{tpu_custom_call.1} parent=1 // pred_region
      %s39 = sadd.s32 0, 1
      %s40 = smul.u32 2, %s39
      %s42 = ssub.s32 4096, 4096
      %43 = vsyncadd [#allocation7], %s42
      %s44 = smul.addr %s40, 128
      %s45 = scalar_lea.hbm %s2, %s44
      %s46 = sshll.u32 [#allocation8], 4
      %s47 = int_to_ptr.vmem [resolvable:$true] %s46
      %52 = dma.hbm_to_vmem [thread:$0]  %s45, 4096, %s47, [#allocation7], 512, 256, 16
    $region13: #{tpu_custom_call.1} parent=1 // pred_fallthru
      _
    // Predicated region
    $region14: #{tpu_custom_call.1} parent=1 // pred_check
      _
    $region15: #{tpu_custom_call.1} parent=1 // pred_check_branch
      %54 = sbr.rel (0) target = $region17
    $region16: #{tpu_custom_call.1} parent=1 // pred_region
      %s56 = ssub.s32 4096, 4096
      %57 = vsyncadd [#allocation10], %s56
      %s58 = sshll.u32 [#allocation9], 4
      %s59 = int_to_ptr.vmem [resolvable:$true] %s58
      %64 = dma.hbm_to_vmem [thread:$0]  %s3, 4096, %s59, [#allocation10], 128, 128, 8
    $region17: #{tpu_custom_call.1} parent=1 // pred_fallthru
      _
    // Predicated region
    $region18: #{tpu_custom_call.1} parent=1 // pred_check
      _
    $region19: #{tpu_custom_call.1} parent=1 // pred_check_branch
      %66 = sbr.rel (0) target = $region21
    $region20: #{tpu_custom_call.1} parent=1 // pred_region
      %67 = dma.done [#allocation4], 256
    $region21: #{tpu_custom_call.1} parent=1 // pred_fallthru
      _
    // Predicated region
    $region22: #{tpu_custom_call.1} parent=1 // pred_check
      _
    $region23: #{tpu_custom_call.1} parent=1 // pred_check_branch
      %69 = sbr.rel (0) target = $region25
    $region24: #{tpu_custom_call.1} parent=1 // pred_region
      %70 = dma.done [#allocation7], 4096
    $region25: #{tpu_custom_call.1} parent=1 // pred_fallthru
      _
    // Predicated region
    $region26: #{tpu_custom_call.1} parent=1 // pred_check
      _
    $region27: #{tpu_custom_call.1} parent=1 // pred_check_branch
      %72 = sbr.rel (0) target = $region29
    $region28: #{tpu_custom_call.1} parent=1 // pred_region
      %73 = dma.done [#allocation7], 4096
    $region29: #{tpu_custom_call.1} parent=1 // pred_fallthru
      _
    // Predicated region
    $region30: #{tpu_custom_call.1} parent=1 // pred_check
      _
    $region31: #{tpu_custom_call.1} parent=1 // pred_check_branch
      %75 = sbr.rel (0) target = $region33
    $region32: #{tpu_custom_call.1} parent=1 // pred_region
      %76 = dma.done [#allocation10], 4096
    $region33: #{tpu_custom_call.1} parent=1 // pred_fallthru
      _
    %s77 = sadd.s32 0, 1
    %s78 = smul.u32 2, %s77
    %p79 = scmp.eq.s32.totalorder 0, 0
    // Predicated region
    $region34: #{tpu_custom_call.1} parent=1 // pred_check
      %p80 = pneg %p79
    $region35: #{tpu_custom_call.1} parent=1 // pred_check_branch
      %82 = sbr.rel (%p80) target = $region37
    $region36: #{tpu_custom_call.1} parent=1 // pred_region
      %83 = vst [vmem:[#allocation2] sm:$0xff] 0.0
      %84 = vst [vmem:[#allocation2 + $0x8] sm:$0xff] 0.0
    $region37: #{tpu_custom_call.1} parent=1 // pred_fallthru
      _
    %v85 = vld [vmem:[#allocation3] sm:$0xff]
    %v86 = vld [vmem:[#allocation3 + $0x8] sm:$0xff]
    %v87 = vld [vmem:[#allocation6] sm:$0xff]
    %v88 = vld [vmem:[#allocation6 + $0x8] sm:$0xff]
    %v89 = vld [vmem:[#allocation6 + $0x10] sm:$0xff]
    %v90 = vld [vmem:[#allocation6 + $0x18] sm:$0xff]
    %v91 = vld [vmem:[#allocation6 + $0x20] sm:$0xff]
    %v92 = vld [vmem:[#allocation6 + $0x28] sm:$0xff]
    %v93 = vld [vmem:[#allocation6 + $0x30] sm:$0xff]
    %v94 = vld [vmem:[#allocation6 + $0x38] sm:$0xff]
    %v95 = vld [vmem:[#allocation6 + $0x40] sm:$0xff]
    %v96 = vld [vmem:[#allocation6 + $0x48] sm:$0xff]
    %v97 = vld [vmem:[#allocation6 + $0x50] sm:$0xff]
    %v98 = vld [vmem:[#allocation6 + $0x58] sm:$0xff]
    %v99 = vld [vmem:[#allocation6 + $0x60] sm:$0xff]
    %v100 = vld [vmem:[#allocation6 + $0x68] sm:$0xff]
    %v101 = vld [vmem:[#allocation6 + $0x70] sm:$0xff]
    %v102 = vld [vmem:[#allocation6 + $0x78] sm:$0xff]
    %v103 = vld [vmem:[#allocation6 + $0x80] sm:$0xff]
    %v104 = vld [vmem:[#allocation6 + $0x88] sm:$0xff]
    %v105 = vld [vmem:[#allocation6 + $0x90] sm:$0xff]
    %v106 = vld [vmem:[#allocation6 + $0x98] sm:$0xff]
    %v107 = vld [vmem:[#allocation6 + $0xa0] sm:$0xff]
    %v108 = vld [vmem:[#allocation6 + $0xa8] sm:$0xff]
    %v109 = vld [vmem:[#allocation6 + $0xb0] sm:$0xff]
    %v110 = vld [vmem:[#allocation6 + $0xb8] sm:$0xff]
    %v111 = vld [vmem:[#allocation6 + $0xc0] sm:$0xff]
    %v112 = vld [vmem:[#allocation6 + $0xc8] sm:$0xff]
    %v113 = vld [vmem:[#allocation6 + $0xd0] sm:$0xff]
    %v114 = vld [vmem:[#allocation6 + $0xd8] sm:$0xff]
    %v115 = vld [vmem:[#allocation6 + $0xe0] sm:$0xff]
    %v116 = vld [vmem:[#allocation6 + $0xe8] sm:$0xff]
    %v117 = vld [vmem:[#allocation6 + $0xf0] sm:$0xff]
    %v118 = vld [vmem:[#allocation6 + $0xf8] sm:$0xff]
    %119 = vmatprep.subr.mxu0 %v88
    %120 = vmatpush1.msra.mxu0 %v87
    %121 = vmatprep.subr.mxu0 %v90
    %122 = vmatpush1.msra.mxu0 %v89
    %123 = vmatprep.subr.mxu0 %v92
    %124 = vmatpush1.msra.mxu0 %v91
    %125 = vmatprep.subr.mxu0 %v94
    %126 = vmatpush1.msra.mxu0 %v93
    %127 = vmatprep.subr.mxu0 %v96
    %128 = vmatpush1.msra.mxu0 %v95
    %129 = vmatprep.subr.mxu0 %v98
    %130 = vmatpush1.msra.mxu0 %v97
    %131 = vmatprep.subr.mxu0 %v100
    %132 = vmatpush1.msra.mxu0 %v99
    %133 = vmatprep.subr.mxu0 %v102
    %134 = vmatpush1.msra.mxu0 %v101
    %135 = vmatprep.subr.mxu0 %v104
    %136 = vmatpush1.msra.mxu0 %v103
    %137 = vmatprep.subr.mxu0 %v106
    %138 = vmatpush1.msra.mxu0 %v105
    %139 = vmatprep.subr.mxu0 %v108
    %140 = vmatpush1.msra.mxu0 %v107
    %141 = vmatprep.subr.mxu0 %v110
    %142 = vmatpush1.msra.mxu0 %v109
    %143 = vmatprep.subr.mxu0 %v112
    %144 = vmatpush1.msra.mxu0 %v111
    %145 = vmatprep.subr.mxu0 %v114
    %146 = vmatpush1.msra.mxu0 %v113
    %147 = vmatprep.subr.mxu0 %v116
    %148 = vmatpush1.msra.mxu0 %v115
    %149 = vmatprep.subr.mxu0 %v118
    %150 = vmatpush1.msra.mxu0 %v117
    %151 = vmatprep.subr.mxu0 0.0
    %152 = vmatpush1.msra.mxu0 0.0
    %153 = vmatprep.subr.mxu0 0.0
    %154 = vmatpush1.msra.mxu0 0.0
    %155 = vmatprep.subr.mxu0 0.0
    %156 = vmatpush1.msra.mxu0 0.0
    %157 = vmatprep.subr.mxu0 0.0
    %158 = vmatpush1.msra.mxu0 0.0
    %159 = vmatprep.subr.mxu0 0.0
    %160 = vmatpush1.msra.mxu0 0.0
    %161 = vmatprep.subr.mxu0 0.0
    %162 = vmatpush1.msra.mxu0 0.0
    %163 = vmatprep.subr.mxu0 0.0
    %164 = vmatpush1.msra.mxu0 0.0
    %165 = vmatprep.subr.mxu0 0.0
    %166 = vmatpush1.msra.mxu0 0.0
    %167 = vmatprep.subr.mxu0 0.0
    %168 = vmatpush1.msra.mxu0 0.0
    %169 = vmatprep.subr.mxu0 0.0
    %170 = vmatpush1.msra.mxu0 0.0
    %171 = vmatprep.subr.mxu0 0.0
    %172 = vmatpush1.msra.mxu0 0.0
    %173 = vmatprep.subr.mxu0 0.0
    %174 = vmatpush1.msra.mxu0 0.0
    %175 = vmatprep.subr.mxu0 0.0
    %176 = vmatpush1.msra.mxu0 0.0
    %177 = vmatprep.subr.mxu0 0.0
    %178 = vmatpush1.msra.mxu0 0.0
    %179 = vmatprep.subr.mxu0 0.0
    %180 = vmatpush1.msra.mxu0 0.0
    %181 = vmatprep.subr.mxu0 0.0
    %182 = vmatpush1.msra.mxu0 0.0
    %183 = vmatprep.mubr.f32.mxu0 0.0
    %184 = vmatmul.mubr.f32.gmra.mrb[0].mxu0 %v85
    %v185 = vpop.f32.mrb[0].mxu0
    %v186 = vadd.f32 0.0, %v185
    %v187 = vpop.f32.mrb[0].mxu0
    %v188 = vadd.f32 0.0, %v187
    %189 = vmatprep.mubr.f32.mxu0 0.0
    %190 = vmatmul.mubr.f32.gmra.mrb[0].mxu0 %v86
    %v191 = vpop.f32.mrb[0].mxu0
    %v192 = vadd.f32 0.0, %v191
    %v193 = vpop.f32.mrb[0].mxu0
    %v194 = vadd.f32 0.0, %v193
    %195 = vdwg.mxu0
    %v196 = vld [vmem:[#allocation8] sm:$0xff]
    %v197 = vld [vmem:[#allocation8 + $0x8] sm:$0xff]
    %v198 = vld [vmem:[#allocation8 + $0x10] sm:$0xff]
    %v199 = vld [vmem:[#allocation8 + $0x18] sm:$0xff]
    %v200 = vld [vmem:[#allocation8 + $0x20] sm:$0xff]
    %v201 = vld [vmem:[#allocation8 + $0x28] sm:$0xff]
    %v202 = vld [vmem:[#allocation8 + $0x30] sm:$0xff]
    %v203 = vld [vmem:[#allocation8 + $0x38] sm:$0xff]
    %v204 = vld [vmem:[#allocation8 + $0x40] sm:$0xff]
    %v205 = vld [vmem:[#allocation8 + $0x48] sm:$0xff]
    %v206 = vld [vmem:[#allocation8 + $0x50] sm:$0xff]
    %v207 = vld [vmem:[#allocation8 + $0x58] sm:$0xff]
    %v208 = vld [vmem:[#allocation8 + $0x60] sm:$0xff]
    %v209 = vld [vmem:[#allocation8 + $0x68] sm:$0xff]
    %v210 = vld [vmem:[#allocation8 + $0x70] sm:$0xff]
    %v211 = vld [vmem:[#allocation8 + $0x78] sm:$0xff]
    %v212 = vld [vmem:[#allocation8 + $0x80] sm:$0xff]
    %v213 = vld [vmem:[#allocation8 + $0x88] sm:$0xff]
    %v214 = vld [vmem:[#allocation8 + $0x90] sm:$0xff]
    %v215 = vld [vmem:[#allocation8 + $0x98] sm:$0xff]
    %v216 = vld [vmem:[#allocation8 + $0xa0] sm:$0xff]
    %v217 = vld [vmem:[#allocation8 + $0xa8] sm:$0xff]
    %v218 = vld [vmem:[#allocation8 + $0xb0] sm:$0xff]
    %v219 = vld [vmem:[#allocation8 + $0xb8] sm:$0xff]
    %v220 = vld [vmem:[#allocation8 + $0xc0] sm:$0xff]
    %v221 = vld [vmem:[#allocation8 + $0xc8] sm:$0xff]
    %v222 = vld [vmem:[#allocation8 + $0xd0] sm:$0xff]
    %v223 = vld [vmem:[#allocation8 + $0xd8] sm:$0xff]
    %v224 = vld [vmem:[#allocation8 + $0xe0] sm:$0xff]
    %v225 = vld [vmem:[#allocation8 + $0xe8] sm:$0xff]
    %v226 = vld [vmem:[#allocation8 + $0xf0] sm:$0xff]
    %v227 = vld [vmem:[#allocation8 + $0xf8] sm:$0xff]
    %228 = vmatprep.subr.mxu0 %v197
    %229 = vmatpush1.msra.mxu0 %v196
    %230 = vmatprep.subr.mxu0 %v199
    %231 = vmatpush1.msra.mxu0 %v198
    %232 = vmatprep.subr.mxu0 %v201
    %233 = vmatpush1.msra.mxu0 %v200
    %234 = vmatprep.subr.mxu0 %v203
    %235 = vmatpush1.msra.mxu0 %v202
    %236 = vmatprep.subr.mxu0 %v205
    %237 = vmatpush1.msra.mxu0 %v204
    %238 = vmatprep.subr.mxu0 %v207
    %239 = vmatpush1.msra.mxu0 %v206
    %240 = vmatprep.subr.mxu0 %v209
    %241 = vmatpush1.msra.mxu0 %v208
    %242 = vmatprep.subr.mxu0 %v211
    %243 = vmatpush1.msra.mxu0 %v210
    %244 = vmatprep.subr.mxu0 %v213
    %245 = vmatpush1.msra.mxu0 %v212
    %246 = vmatprep.subr.mxu0 %v215
    %247 = vmatpush1.msra.mxu0 %v214
    %248 = vmatprep.subr.mxu0 %v217
    %249 = vmatpush1.msra.mxu0 %v216
    %250 = vmatprep.subr.mxu0 %v219
    %251 = vmatpush1.msra.mxu0 %v218
    %252 = vmatprep.subr.mxu0 %v221
    %253 = vmatpush1.msra.mxu0 %v220
    %254 = vmatprep.subr.mxu0 %v223
    %255 = vmatpush1.msra.mxu0 %v222
    %256 = vmatprep.subr.mxu0 %v225
    %257 = vmatpush1.msra.mxu0 %v224
    %258 = vmatprep.subr.mxu0 %v227
    %259 = vmatpush1.msra.mxu0 %v226
    %260 = vmatprep.subr.mxu0 0.0
    %261 = vmatpush1.msra.mxu0 0.0
    %262 = vmatprep.subr.mxu0 0.0
    %263 = vmatpush1.msra.mxu0 0.0
    %264 = vmatprep.subr.mxu0 0.0
    %265 = vmatpush1.msra.mxu0 0.0
    %266 = vmatprep.subr.mxu0 0.0
    %267 = vmatpush1.msra.mxu0 0.0
    %268 = vmatprep.subr.mxu0 0.0
    %269 = vmatpush1.msra.mxu0 0.0
    %270 = vmatprep.subr.mxu0 0.0
    %271 = vmatpush1.msra.mxu0 0.0
    %272 = vmatprep.subr.mxu0 0.0
    %273 = vmatpush1.msra.mxu0 0.0
    %274 = vmatprep.subr.mxu0 0.0
    %275 = vmatpush1.msra.mxu0 0.0
    %276 = vmatprep.subr.mxu0 0.0
    %277 = vmatpush1.msra.mxu0 0.0
    %278 = vmatprep.subr.mxu0 0.0
    %279 = vmatpush1.msra.mxu0 0.0
    %280 = vmatprep.subr.mxu0 0.0
    %281 = vmatpush1.msra.mxu0 0.0
    %282 = vmatprep.subr.mxu0 0.0
    %283 = vmatpush1.msra.mxu0 0.0
    %284 = vmatprep.subr.mxu0 0.0
    %285 = vmatpush1.msra.mxu0 0.0
    %286 = vmatprep.subr.mxu0 0.0
    %287 = vmatpush1.msra.mxu0 0.0
    %288 = vmatprep.subr.mxu0 0.0
    %289 = vmatpush1.msra.mxu0 0.0
    %290 = vmatprep.subr.mxu0 0.0
    %291 = vmatpush1.msra.mxu0 0.0
    %292 = vmatprep.mubr.f32.mxu0 0.0
    %293 = vmatmul.mubr.f32.gmra.mrb[0].mxu0 %v85
    %v294 = vpop.f32.mrb[0].mxu0
    %v295 = vadd.f32 0.0, %v294
    %v296 = vpop.f32.mrb[0].mxu0
    %v297 = vadd.f32 0.0, %v296
    %298 = vmatprep.mubr.f32.mxu0 0.0
    %299 = vmatmul.mubr.f32.gmra.mrb[0].mxu0 %v86
    %v300 = vpop.f32.mrb[0].mxu0
    %v301 = vadd.f32 0.0, %v300
    %v302 = vpop.f32.mrb[0].mxu0
    %v303 = vadd.f32 0.0, %v302
    %304 = vdwg.mxu0
    %v305 = vxor.u32 %v186, 2147483648
    %v306 = vxor.u32 %v188, 2147483648
    %v307 = vxor.u32 %v192, 2147483648
    %v308 = vxor.u32 %v194, 2147483648
    %v309 = vmul.f32 %v305, 1.442695
    %v310 = vpow.pop %v309
    %v311 = vmul.f32 %v306, 1.442695
    %v312 = vpow.pop %v311
    %v313 = vmul.f32 %v307, 1.442695
    %v314 = vpow.pop %v313
    %v315 = vmul.f32 %v308, 1.442695
    %v316 = vpow.pop %v315
    %v317 = vadd.f32 %v310, 1.0
    %v318 = vadd.f32 %v312, 1.0
    %v319 = vadd.f32 %v314, 1.0
    %v320 = vadd.f32 %v316, 1.0
    %v321 = vrcp.pop %v317
    %v322 = vmul.f32 1.0, %v321
    %v323 = vrcp.pop %v318
    %v324 = vmul.f32 1.0, %v323
    %v325 = vrcp.pop %v319
    %v326 = vmul.f32 1.0, %v325
    %v327 = vrcp.pop %v320
    %v328 = vmul.f32 1.0, %v327
    %v329 = vmul.f32 %v186, %v322
    %v330 = vmul.f32 %v188, %v324
    %v331 = vmul.f32 %v192, %v326
    %v332 = vmul.f32 %v194, %v328
    %v333 = vmul.f32 %v329, %v295
    %v334 = vmul.f32 %v330, %v297
    %v335 = vmul.f32 %v331, %v301
    %v336 = vmul.f32 %v332, %v303
    %v337 = vld [vmem:[#allocation2] sm:$0xff]
    %v338 = vld [vmem:[#allocation2 + $0x8] sm:$0xff]
    %v339 = vld [vmem:[#allocation9] sm:$0xff]
    %v340 = vld [vmem:[#allocation9 + $0x8] sm:$0xff]
    %v341 = vld [vmem:[#allocation9 + $0x10] sm:$0xff]
    %v342 = vld [vmem:[#allocation9 + $0x18] sm:$0xff]
    %v343 = vld [vmem:[#allocation9 + $0x20] sm:$0xff]
    %v344 = vld [vmem:[#allocation9 + $0x28] sm:$0xff]
    %v345 = vld [vmem:[#allocation9 + $0x30] sm:$0xff]
    %v346 = vld [vmem:[#allocation9 + $0x38] sm:$0xff]
    %v347 = vld [vmem:[#allocation9 + $0x40] sm:$0xff]
    %v348 = vld [vmem:[#allocation9 + $0x48] sm:$0xff]
    %v349 = vld [vmem:[#allocation9 + $0x50] sm:$0xff]
    %v350 = vld [vmem:[#allocation9 + $0x58] sm:$0xff]
    %v351 = vld [vmem:[#allocation9 + $0x60] sm:$0xff]
    %v352 = vld [vmem:[#allocation9 + $0x68] sm:$0xff]
    %v353 = vld [vmem:[#allocation9 + $0x70] sm:$0xff]
    %v354 = vld [vmem:[#allocation9 + $0x78] sm:$0xff]
    %v355 = vld [vmem:[#allocation9 + $0x80] sm:$0xff]
    %v356 = vld [vmem:[#allocation9 + $0x88] sm:$0xff]
    %v357 = vld [vmem:[#allocation9 + $0x90] sm:$0xff]
    %v358 = vld [vmem:[#allocation9 + $0x98] sm:$0xff]
    %v359 = vld [vmem:[#allocation9 + $0xa0] sm:$0xff]
    %v360 = vld [vmem:[#allocation9 + $0xa8] sm:$0xff]
    %v361 = vld [vmem:[#allocation9 + $0xb0] sm:$0xff]
    %v362 = vld [vmem:[#allocation9 + $0xb8] sm:$0xff]
    %v363 = vld [vmem:[#allocation9 + $0xc0] sm:$0xff]
    %v364 = vld [vmem:[#allocation9 + $0xc8] sm:$0xff]
    %v365 = vld [vmem:[#allocation9 + $0xd0] sm:$0xff]
    %v366 = vld [vmem:[#allocation9 + $0xd8] sm:$0xff]
    %v367 = vld [vmem:[#allocation9 + $0xe0] sm:$0xff]
    %v368 = vld [vmem:[#allocation9 + $0xe8] sm:$0xff]
    %v369 = vld [vmem:[#allocation9 + $0xf0] sm:$0xff]
    %v370 = vld [vmem:[#allocation9 + $0xf8] sm:$0xff]
    %371 = vmatprep.subr.mxu0 0.0
    %372 = vmatpush1.msra.mxu0 %v339
    %373 = vmatprep.subr.mxu0 0.0
    %374 = vmatpush1.msra.mxu0 %v340
    %375 = vmatprep.subr.mxu0 0.0
    %376 = vmatpush1.msra.mxu0 %v341
    %377 = vmatprep.subr.mxu0 0.0
    %378 = vmatpush1.msra.mxu0 %v342
    %379 = vmatprep.subr.mxu0 0.0
    %380 = vmatpush1.msra.mxu0 %v343
    %381 = vmatprep.subr.mxu0 0.0
    %382 = vmatpush1.msra.mxu0 %v344
    %383 = vmatprep.subr.mxu0 0.0
    %384 = vmatpush1.msra.mxu0 %v345
    %385 = vmatprep.subr.mxu0 0.0
    %386 = vmatpush1.msra.mxu0 %v346
    %387 = vmatprep.subr.mxu0 0.0
    %388 = vmatpush1.msra.mxu0 %v347
    %389 = vmatprep.subr.mxu0 0.0
    %390 = vmatpush1.msra.mxu0 %v348
    %391 = vmatprep.subr.mxu0 0.0
    %392 = vmatpush1.msra.mxu0 %v349
    %393 = vmatprep.subr.mxu0 0.0
    %394 = vmatpush1.msra.mxu0 %v350
    %395 = vmatprep.subr.mxu0 0.0
    %396 = vmatpush1.msra.mxu0 %v351
    %397 = vmatprep.subr.mxu0 0.0
    %398 = vmatpush1.msra.mxu0 %v352
    %399 = vmatprep.subr.mxu0 0.0
    %400 = vmatpush1.msra.mxu0 %v353
    %401 = vmatprep.subr.mxu0 0.0
    %402 = vmatpush1.msra.mxu0 %v354
    %403 = vmatprep.subr.mxu0 0.0
    %404 = vmatpush1.msra.mxu0 %v355
    %405 = vmatprep.subr.mxu0 0.0
    %406 = vmatpush1.msra.mxu0 %v356
    %407 = vmatprep.subr.mxu0 0.0
    %408 = vmatpush1.msra.mxu0 %v357
    %409 = vmatprep.subr.mxu0 0.0
    %410 = vmatpush1.msra.mxu0 %v358
    %411 = vmatprep.subr.mxu0 0.0
    %412 = vmatpush1.msra.mxu0 %v359
    %413 = vmatprep.subr.mxu0 0.0
    %414 = vmatpush1.msra.mxu0 %v360
    %415 = vmatprep.subr.mxu0 0.0
    %416 = vmatpush1.msra.mxu0 %v361
    %417 = vmatprep.subr.mxu0 0.0
    %418 = vmatpush1.msra.mxu0 %v362
    %419 = vmatprep.subr.mxu0 0.0
    %420 = vmatpush1.msra.mxu0 %v363
    %421 = vmatprep.subr.mxu0 0.0
    %422 = vmatpush1.msra.mxu0 %v364
    %423 = vmatprep.subr.mxu0 0.0
    %424 = vmatpush1.msra.mxu0 %v365
    %425 = vmatprep.subr.mxu0 0.0
    %426 = vmatpush1.msra.mxu0 %v366
    %427 = vmatprep.subr.mxu0 0.0
    %428 = vmatpush1.msra.mxu0 %v367
    %429 = vmatprep.subr.mxu0 0.0
    %430 = vmatpush1.msra.mxu0 %v368
    %431 = vmatprep.subr.mxu0 0.0
    %432 = vmatpush1.msra.mxu0 %v369
    %433 = vmatprep.subr.mxu0 0.0
    %434 = vmatpush1.msra.mxu0 %v370
    %435 = vmatprep.mubr.f32.mxu0 %v334
    %436 = vmatmul.mubr.f32.gmra.mrb[0].mxu0 %v333
    %v437 = vpop.f32.mrb[0].mxu0
    %v438 = vadd.f32 0.0, %v437
    %v439 = vpop.f32.mrb[0].mxu0
    %440 = vmatprep.mubr.f32.mxu0 %v336
    %441 = vmatmul.mubr.f32.gmra.mrb[0].mxu0 %v335
    %v442 = vpop.f32.mrb[0].mxu0
    %v443 = vadd.f32 0.0, %v442
    %v444 = vpop.f32.mrb[0].mxu0
    %445 = vdwg.mxu0
    %v446 = vadd.f32 %v337, %v438
    %v447 = vadd.f32 %v338, %v443
    %448 = vst [vmem:[#allocation2] sm:$0xff] %v446
    %449 = vst [vmem:[#allocation2 + $0x8] sm:$0xff] %v447
    // Predicated region
    $region38: #{tpu_custom_call.1} parent=1 // pred_check
      %p450 = pneg %p79
    $region39: #{tpu_custom_call.1} parent=1 // pred_check_branch
      %452 = sbr.rel (%p450) target = $region41
    $region40: #{tpu_custom_call.1} parent=1 // pred_region
      %v453 = vld [vmem:[#allocation2] sm:$0xff]
      %v454 = vld [vmem:[#allocation2 + $0x8] sm:$0xff]
      %455 = vst [vmem:[#allocation11] sm:$0xff] %v453
      %456 = vst [vmem:[#allocation11 + $0x8] sm:$0xff] %v454
    $region41: #{tpu_custom_call.1} parent=1 // pred_fallthru
      _
    // Predicated region
    $region42: #{tpu_custom_call.1} parent=1 // pred_check
      _
    $region43: #{tpu_custom_call.1} parent=1 // pred_check_branch
      %458 = sbr.rel (0) target = $region45
    $region44: #{tpu_custom_call.1} parent=1 // pred_region
      %s460 = ssub.s32 256, 256
      %461 = vsyncadd [#allocation5], %s460
      %s462 = sshll.u32 [#allocation11], 4
      %s463 = int_to_ptr.vmem [resolvable:$true] %s462
      %468 = dma.vmem_to_hbm [thread:$0]  %s463, 256, %s4, [#allocation5], 128, 128, 8
    $region45: #{tpu_custom_call.1} parent=1 // pred_fallthru
      _
    // Predicated region
    $region46: #{tpu_custom_call.1} parent=1 // pred_check
      _
    $region47: #{tpu_custom_call.1} parent=1 // pred_check_branch
      %470 = sbr.rel (0) target = $region49
    $region48: #{tpu_custom_call.1} parent=1 // pred_region
      %471 = dma.done [#allocation5], 256
    $region49: #{tpu_custom_call.1} parent=1 // pred_fallthru
      _
    %472 = vsyncpa [#allocation4], 1
    %473 = vsyncpa [#allocation7], 1
    %474 = vsyncpa [#allocation10], 1
    %475 = vsyncpa [#allocation5], 1

</llo_original>
